<compile_context>
chip_gen: v7x
topology: tpu7x:2x2x1
jax: 0.10.0
libtpu: 0.0.40
codegen_flags: <defaults>
</compile_context>

<pallas_src>
import numpy as np
import jax
import jax.numpy as jnp
from jax.experimental import pallas as pl
from jax.experimental.pallas import tpu as pltpu


def _logit_scale_kernel(scale_ref, x_ref, o_ref):
    # scale_ref: SMEM (1,) f32 scalar-prefetch holding exp(logit_scale),
    #            already exponentiated in the wrapper.
    # x_ref/o_ref: VMEM tiles of the input/output.
    s = scale_ref[0]
    if o_ref.dtype != jnp.float32:
        # Keep bf16 tiles multiplying in bf16 (v6e/v7x VPU); f32 stays f32.
        s = s.astype(o_ref.dtype)
    o_ref[...] = x_ref[...] * s


def logit_scale_forward(x, logit_scale, *, tile_m=512, tile_n=2048,
                        donate_x=False):
    """Apply y = x * exp(logit_scale) with a Pallas TPU kernel.

    x: float array of any rank (last dim maps to lanes).
    logit_scale: scalar (0-d or shape-(1,)) float parameter value (pre-exp).
    donate_x: alias x's HBM buffer to the output (only if caller no longer
              needs x) to avoid a second M x N HBM allocation.
    """
    orig_shape = x.shape
    x2 = x.reshape(1, -1) if x.ndim == 1 else x.reshape(-1, orig_shape[-1])
    M, N = x2.shape

    # exp of the scalar parameter, computed once outside the grid loop.
    scale_exp = jnp.exp(jnp.asarray(logit_scale, dtype=jnp.float32)).reshape((1,))

    # Block sizing: big lane-dense blocks, clamped to the full array extent
    # when the array is smaller than a tile (full-dim blocks are always legal;
    # 512 / 2048 are multiples of the (8|16|32, 128) tiling minimums).
    bm = M if M <= tile_m else tile_m
    bn = N if N <= tile_n else tile_n
    grid = (pl.cdiv(M, bm), pl.cdiv(N, bn))

    grid_spec = pltpu.PrefetchScalarGridSpec(
        num_scalar_prefetch=1,
        grid=grid,
        in_specs=[pl.BlockSpec((bm, bn), lambda i, j, scale: (i, j))],
        out_specs=pl.BlockSpec((bm, bn), lambda i, j, scale: (i, j)),
    )

    out = pl.pallas_call(
        _logit_scale_kernel,
        out_shape=jax.ShapeDtypeStruct((M, N), x2.dtype),
        grid_spec=grid_spec,
        compiler_params=pltpu.CompilerParams(
            dimension_semantics=("parallel", "parallel"),
            vmem_limit_bytes=40 * 1024 * 1024,
        ),
        # Input 0 is the scalar prefetch, input 1 is x.
        input_output_aliases=({1: 0} if donate_x else {}),
    )(scale_exp, x2)

    return out.reshape(orig_shape)


if __name__ == "__main__":
    # Deterministic "parameter" init, mirroring the module __init__:
    #   logit_scale = log(config.logit_scale), e.g. config.logit_scale = 1/0.07
    config_logit_scale = 1.0 / 0.07
    logit_scale_param = jnp.float32(np.log(config_logit_scale))

    # Small logits matrix (e.g. query-batch x doc-batch similarity scores).
    key = jax.random.PRNGKey(0)
    x = jax.random.normal(key, (64, 256), dtype=jnp.float32)

    y = logit_scale_forward(x, logit_scale_param)
    y = jax.block_until_ready(y)

    # Reference check (plain JAX)
    y_ref = x * jnp.exp(logit_scale_param)
    np.testing.assert_allclose(np.asarray(y), np.asarray(y_ref),
                               rtol=1e-6, atol=1e-6)

    print("KERNEL_OK")
</pallas_src>

<mosaic_0001>
module attributes {stable_mosaic.version = 11 : i64} {
  func.func @_logit_scale_kernel(%arg0: i32, %arg1: i32, %arg2: memref<1xf32, #tpu.memory_space<smem>>, %arg3: memref<64x256xf32, #tpu.memory_space<vmem>>, %arg4: memref<64x256xf32, #tpu.memory_space<vmem>>) attributes {dimension_semantics = [#tpu.dimension_semantics<parallel>, #tpu.dimension_semantics<parallel>], iteration_bounds = array<i64: 1, 1>, scalar_prefetch = 1 : i64, scratch_operands = 0 : i64, tpu.core_type = #tpu.core_type<tc>, window_params = [{transform_indices = @transform_0, window_bounds = array<i64: 64, 256>}, {transform_indices = @transform_1, window_bounds = array<i64: 64, 256>}]} {
    %c0 = arith.constant 0 : index
    %0 = memref.load %arg2[%c0] : memref<1xf32, #tpu.memory_space<smem>>
    %c0_0 = arith.constant 0 : index
    %c0_1 = arith.constant 0 : index
    %1 = vector.load %arg3[%c0_0, %c0_1] : memref<64x256xf32, #tpu.memory_space<vmem>>, vector<64x256xf32>
    %2 = vector.broadcast %0 : f32 to vector<64x256xf32>
    %3 = arith.mulf %1, %2 : vector<64x256xf32>
    %c0_2 = arith.constant 0 : index
    %c0_3 = arith.constant 0 : index
    %4 = vector.load %arg4[%c0_2, %c0_3] : memref<64x256xf32, #tpu.memory_space<vmem>>, vector<64x256xf32>
    tpu.vector_store %arg4[%c0_2, %c0_3], %3 {strides = array<i32>} : memref<64x256xf32, #tpu.memory_space<vmem>>, vector<64x256xf32>,
    return
  }
  func.func @transform_0(%arg0: i32, %arg1: i32, %arg2: memref<1xf32, #tpu.memory_space<smem>>) -> (i32, i32) {
    %c0_i32 = arith.constant 0 : i32
    return %arg0, %arg1 : i32, i32
  }
  func.func @transform_1(%arg0: i32, %arg1: i32, %arg2: memref<1xf32, #tpu.memory_space<smem>>) -> (i32, i32) {
    %c0_i32 = arith.constant 0 : i32
    return %arg0, %arg1 : i32, i32
  }
}

</mosaic_0001>

<llo_original>
// kernel: tpu_custom_call.1
$region0: #{tpu_custom_call.1}
  #allocation0 [shape = 'u32[]', space=smem, size = 0x4, offset = 0x4, fixed_abs, tag = 'smem constant byte address 0x4 - core index']
  #allocation1 [shape = 'u32[144,128]{1,0:T(1,128)}', space=vmem, size = 0x12000, scoped, tag = 'internal scratch']
  #allocation2 [shape = 's32[1]{0}', space=sflag, size = 0x4, scoped, tag = 'scoped memory for tpu_custom_call.1']
  #allocation3 [shape = 'f32[1]{0:T(128)S(6)}', space=smem, size = 0x200, scoped, tag = 'prefetched SMEM operand 0']
  %s0 = inlined_call_operand.<no memory space> [shape: f32[1], index: 0, kind: input, shape index: {}]
  %s1 = inlined_call_operand.hbm [shape: f32[64,256], index: 1, kind: input, shape index: {}]
  %s2 = inlined_call_operand.hbm [shape: f32[64,256], index: 2, kind: output, shape index: {}]
  %s3 = sld [smem:[#allocation0]]
  $region18: #{tpu_custom_call.1} parent=0
    _
  %s5 = ssub.s32 1, %s3
  %s6 = scalar_select 0, %s5, %s3
  %7 = sst [smem:[#allocation3]] %s0
  $region1: #{tpu_custom_call.1} parent=0
    #allocation4 [shape = 'u8[65536]{0}', space=vmem, size = 0x10000, scoped, tag = 'input window, operand 1, single buffered']
    #allocation5 [shape = 's32[1]{0}', space=sflag, size = 0x4, scoped, tag = 'scoped memory for tpu_custom_call.1']
    #allocation6 [shape = 's32[1]{0}', space=sflag, size = 0x4, scoped, tag = 'scoped memory for tpu_custom_call.1']
    #allocation7 [shape = 'u8[65536]{0}', space=vmem, size = 0x10000, scoped, tag = 'output window, operand 0, single buffered']
    %8 = vsyncpa [#allocation5], 0
    %9 = vsyncpa [#allocation6], 0
    // Predicated region
    $region2: #{tpu_custom_call.1} parent=1 // pred_check
      _
    $region3: #{tpu_custom_call.1} parent=1 // pred_check_branch
      %11 = sbr.rel (0) target = $region5
    $region4: #{tpu_custom_call.1} parent=1 // pred_region
      %s13 = ssub.s32 2048, 2048
      %14 = vsyncadd [#allocation5], %s13
      %s15 = sshll.u32 [#allocation4], 4
      %s16 = int_to_ptr.vmem [resolvable:$true] %s15
      %21 = dma.hbm_to_vmem [thread:$0]  %s1, 2048, %s16, [#allocation5], 256, 256, 16
    $region5: #{tpu_custom_call.1} parent=1 // pred_fallthru
      _
    // Predicated region
    $region6: #{tpu_custom_call.1} parent=1 // pred_check
      _
    $region7: #{tpu_custom_call.1} parent=1 // pred_check_branch
      %23 = sbr.rel (0) target = $region9
    $region8: #{tpu_custom_call.1} parent=1 // pred_region
      %24 = dma.done [#allocation5], 2048
    $region9: #{tpu_custom_call.1} parent=1 // pred_fallthru
      _
    %s25 = sld [smem:[#allocation3]]
    %v26 = vld [vmem:[#allocation4] sm:$0xff]
    %v27 = vld [vmem:[#allocation4 + $0x8] sm:$0xff]
    %v28 = vld [vmem:[#allocation4 + $0x10] sm:$0xff]
    %v29 = vld [vmem:[#allocation4 + $0x18] sm:$0xff]
    %v30 = vld [vmem:[#allocation4 + $0x20] sm:$0xff]
    %v31 = vld [vmem:[#allocation4 + $0x28] sm:$0xff]
    %v32 = vld [vmem:[#allocation4 + $0x30] sm:$0xff]
    %v33 = vld [vmem:[#allocation4 + $0x38] sm:$0xff]
    %v34 = vld [vmem:[#allocation4 + $0x40] sm:$0xff]
    %v35 = vld [vmem:[#allocation4 + $0x48] sm:$0xff]
    %v36 = vld [vmem:[#allocation4 + $0x50] sm:$0xff]
    %v37 = vld [vmem:[#allocation4 + $0x58] sm:$0xff]
    %v38 = vld [vmem:[#allocation4 + $0x60] sm:$0xff]
    %v39 = vld [vmem:[#allocation4 + $0x68] sm:$0xff]
    %v40 = vld [vmem:[#allocation4 + $0x70] sm:$0xff]
    %v41 = vld [vmem:[#allocation4 + $0x78] sm:$0xff]
    %v42 = vstv %s25
    %v43 = vmul.f32 %v26, %v42
    %v44 = vmul.f32 %v27, %v42
    %v45 = vmul.f32 %v28, %v42
    %v46 = vmul.f32 %v29, %v42
    %v47 = vmul.f32 %v30, %v42
    %v48 = vmul.f32 %v31, %v42
    %v49 = vmul.f32 %v32, %v42
    %v50 = vmul.f32 %v33, %v42
    %v51 = vmul.f32 %v34, %v42
    %v52 = vmul.f32 %v35, %v42
    %v53 = vmul.f32 %v36, %v42
    %v54 = vmul.f32 %v37, %v42
    %v55 = vmul.f32 %v38, %v42
    %v56 = vmul.f32 %v39, %v42
    %v57 = vmul.f32 %v40, %v42
    %v58 = vmul.f32 %v41, %v42
    %59 = vst [vmem:[#allocation7] sm:$0xff] %v43
    %60 = vst [vmem:[#allocation7 + $0x8] sm:$0xff] %v44
    %61 = vst [vmem:[#allocation7 + $0x10] sm:$0xff] %v45
    %62 = vst [vmem:[#allocation7 + $0x18] sm:$0xff] %v46
    %63 = vst [vmem:[#allocation7 + $0x20] sm:$0xff] %v47
    %64 = vst [vmem:[#allocation7 + $0x28] sm:$0xff] %v48
    %65 = vst [vmem:[#allocation7 + $0x30] sm:$0xff] %v49
    %66 = vst [vmem:[#allocation7 + $0x38] sm:$0xff] %v50
    %67 = vst [vmem:[#allocation7 + $0x40] sm:$0xff] %v51
    %68 = vst [vmem:[#allocation7 + $0x48] sm:$0xff] %v52
    %69 = vst [vmem:[#allocation7 + $0x50] sm:$0xff] %v53
    %70 = vst [vmem:[#allocation7 + $0x58] sm:$0xff] %v54
    %71 = vst [vmem:[#allocation7 + $0x60] sm:$0xff] %v55
    %72 = vst [vmem:[#allocation7 + $0x68] sm:$0xff] %v56
    %73 = vst [vmem:[#allocation7 + $0x70] sm:$0xff] %v57
    %74 = vst [vmem:[#allocation7 + $0x78] sm:$0xff] %v58
    // Predicated region
    $region10: #{tpu_custom_call.1} parent=1 // pred_check
      _
    $region11: #{tpu_custom_call.1} parent=1 // pred_check_branch
      %76 = sbr.rel (0) target = $region13
    $region12: #{tpu_custom_call.1} parent=1 // pred_region
      %s78 = ssub.s32 2048, 2048
      %79 = vsyncadd [#allocation6], %s78
      %s80 = sshll.u32 [#allocation7], 4
      %s81 = int_to_ptr.vmem [resolvable:$true] %s80
      %86 = dma.vmem_to_hbm [thread:$0]  %s81, 2048, %s2, [#allocation6], 256, 256, 16
    $region13: #{tpu_custom_call.1} parent=1 // pred_fallthru
      _
    // Predicated region
    $region14: #{tpu_custom_call.1} parent=1 // pred_check
      _
    $region15: #{tpu_custom_call.1} parent=1 // pred_check_branch
      %88 = sbr.rel (0) target = $region17
    $region16: #{tpu_custom_call.1} parent=1 // pred_region
      %89 = dma.done [#allocation6], 2048
    $region17: #{tpu_custom_call.1} parent=1 // pred_fallthru
      _
    %90 = vsyncpa [#allocation5], 1
    %91 = vsyncpa [#allocation6], 1

</llo_original>
